<compile_context>
chip_gen: v6e
topology: v6e:2x2x1
jax: 0.10.0
libtpu: 0.0.40
codegen_flags: <defaults>
</compile_context>

<pallas_src>
import functools
import math

import jax
import jax.numpy as jnp
from jax.experimental import pallas as pl
from jax.experimental.pallas import tpu as pltpu


_LANES = 128
_SUBLANES = 8
_VMEM_LIMIT_BYTES = 48 * 1024 * 1024    # fits v7x's 64 MiB physical VMEM
_TARGET_TILE_BYTES = 4 * 1024 * 1024    # per-block bytes for the two-pass path
_FUSED_MAX_BYTES = 6 * 1024 * 1024      # packed f32 bytes handled by fused path
_FUSED_CHUNK_BYTES = 1 * 1024 * 1024    # in-kernel chunk size for fused path


def _layout(d):
    """Lane packing: k original rows per packed row, lanes = k*d (mult. of 128)."""
    k = _LANES // math.gcd(d, _LANES)
    return k, k * d


def _tile_rows(rows2, lanes, tile_bytes):
    tr = max(_SUBLANES, (tile_bytes // (4 * lanes)) // _SUBLANES * _SUBLANES)
    if rows2 <= tr:
        return max(rows2, 1), 1           # single full-extent block
    return tr, -(-rows2 // tr)


# ---------------------------------------------------------------------------
# Kernels
# ---------------------------------------------------------------------------
def _fused_train_kernel(x_ref, mean_ref, var_ref, rate_ref,
                        y_ref, mean_o_ref, var_o_ref, stdinv_o_ref,
                        *, k, d, batch, eps, clip, chunk):
    """Stats + running-stat update + normalize, x read from HBM exactly once."""
    rows, lanes = x_ref.shape
    nvalid = batch * d
    need_mask = rows * lanes != nvalid
    mean_old = mean_ref[...]              # (1, L) f32, lane-tiled
    var_old = var_ref[...]

    # Pass 1 over the VMEM-resident block: shifted sum / sum-of-squares.
    s1 = jnp.zeros((1, lanes), jnp.float32)
    s2 = jnp.zeros((1, lanes), jnp.float32)
    starts = list(range(0, rows, chunk))
    for st in starts:
        ch = min(chunk, rows - st)
        xb = x_ref[st:st + ch, :].astype(jnp.float32)
        xc = xb - mean_old
        if need_mask:
            flat = ((jax.lax.broadcasted_iota(jnp.int32, (ch, lanes), 0) + st)
                    * lanes
                    + jax.lax.broadcasted_iota(jnp.int32, (ch, lanes), 1))
            xc = jnp.where(flat < nvalid, xc, 0.0)
        s1 = s1 + jnp.sum(xc, axis=0, keepdims=True)
        s2 = s2 + jnp.sum(xc * xc, axis=0, keepdims=True)

    # Fold the k lane groups: summing all cyclic shifts by multiples of d gives
    # the per-feature total already broadcast across every lane group.
    if k > 1:
        t1, t2 = s1, s2
        for j in range(1, k):
            t1 = t1 + pltpu.roll(s1, shift=j * d, axis=1)
            t2 = t2 + pltpu.roll(s2, shift=j * d, axis=1)
        s1, s2 = t1, t2

    # Running-stat (Welford-style) update, all in the lane-tiled layout.
    inv_b = 1.0 / float(batch)
    m1 = s1 * inv_b                                    # mean_x - mean_old
    var_x = jnp.maximum(s2 * inv_b - m1 * m1, 0.0)
    rate = rate_ref[0]
    mean_new = mean_old + rate * m1
    var_new = var_old + rate * (var_x - var_old + m1 * (m1 - rate * m1))
    stdinv = jax.lax.rsqrt(var_new + eps)
    mean_o_ref[...] = mean_new
    var_o_ref[...] = var_new
    stdinv_o_ref[...] = stdinv

    # Pass 2 from the same VMEM-resident block: normalize with the NEW stats.
    for st in starts:
        ch = min(chunk, rows - st)
        xb = x_ref[st:st + ch, :].astype(jnp.float32)
        y = (xb - mean_new) * stdinv
        if clip is not None:
            y = jnp.clip(y, -clip, clip)
        y_ref[st:st + ch, :] = y.astype(y_ref.dtype)


def _stats_kernel(x_ref, mean_ref, sum1_ref, sum2_ref,
                  *, tiles_per_core, tile_rows, batch, d, need_mask):
    """Accumulate shifted sum / sum-of-squares; one accumulator block per core."""
    i = pl.program_id(1)

    @pl.when(i == 0)
    def _():
        sum1_ref[...] = jnp.zeros_like(sum1_ref)
        sum2_ref[...] = jnp.zeros_like(sum2_ref)

    lanes = x_ref.shape[1]
    xc = x_ref[...].astype(jnp.float32) - mean_ref[...]
    if need_mask:
        # Validity = flat element index < batch*d of the packed row-major view.
        # Handles ragged tails, partial edge tiles and clamped duplicate tiles.
        t = pl.program_id(0) * tiles_per_core + i
        flat = ((jax.lax.broadcasted_iota(jnp.int32, xc.shape, 0)
                 + t * tile_rows) * lanes
                + jax.lax.broadcasted_iota(jnp.int32, xc.shape, 1))
        xc = jnp.where(flat < batch * d, xc, 0.0)
    sum1_ref[0:1, :] = sum1_ref[0:1, :] + jnp.sum(xc, axis=0, keepdims=True)
    sum2_ref[0:1, :] = sum2_ref[0:1, :] + jnp.sum(xc * xc, axis=0, keepdims=True)


def _normalize_kernel(x_ref, mean_ref, stdinv_ref, y_ref, *, clip):
    y = (x_ref[...].astype(jnp.float32) - mean_ref[...]) * stdinv_ref[...]
    if clip is not None:
        y = jnp.clip(y, -clip, clip)
    y_ref[...] = y.astype(y_ref.dtype)


# ---------------------------------------------------------------------------
# pallas_call wrappers
# ---------------------------------------------------------------------------
def _fused_call(x2, mean_t, var_t, rate_arr, *, k, d, batch, eps, clip):
    rows, lanes = x2.shape
    chunk = max(_SUBLANES,
                (_FUSED_CHUNK_BYTES // (4 * lanes)) // _SUBLANES * _SUBLANES)
    kernel = functools.partial(_fused_train_kernel, k=k, d=d, batch=batch,
                               eps=eps, clip=clip, chunk=chunk)
    return pl.pallas_call(
        kernel,
        out_shape=(jax.ShapeDtypeStruct((rows, lanes), x2.dtype),
                   jax.ShapeDtypeStruct((1, lanes), jnp.float32),
                   jax.ShapeDtypeStruct((1, lanes), jnp.float32),
                   jax.ShapeDtypeStruct((1, lanes), jnp.float32)),
        grid=(1,),
        in_specs=[pl.BlockSpec((rows, lanes), lambda i: (0, 0)),
                  pl.BlockSpec((1, lanes), lambda i: (0, 0)),
                  pl.BlockSpec((1, lanes), lambda i: (0, 0)),
                  pl.BlockSpec(memory_space=pltpu.MemorySpace.SMEM)],
        out_specs=(pl.BlockSpec((rows, lanes), lambda i: (0, 0)),
                   pl.BlockSpec((1, lanes), lambda i: (0, 0)),
                   pl.BlockSpec((1, lanes), lambda i: (0, 0)),
                   pl.BlockSpec((1, lanes), lambda i: (0, 0))),
        compiler_params=pltpu.CompilerParams(
            dimension_semantics=("arbitrary",),
            vmem_limit_bytes=_VMEM_LIMIT_BYTES),
    )(x2, mean_t, var_t, rate_arr)


def _stats_call(x2, mean_t, *, tile_rows, num_tiles, split, batch, d):
    rows2, lanes = x2.shape
    tpc = -(-num_tiles // split)                      # tiles per core
    need_mask = (split * tpc != num_tiles
                 or num_tiles * tile_rows != rows2
                 or rows2 * lanes != batch * d)
    kernel = functools.partial(_stats_kernel, tiles_per_core=tpc,
                               tile_rows=tile_rows, batch=batch, d=d,
                               need_mask=need_mask)

    def x_map(c, i):
        # Clamp so the block index never leaves the array; the duplicated tile
        # (when num_tiles is odd) is fully masked out inside the kernel.
        return (jnp.minimum(c * tpc + i, num_tiles - 1), 0)

    return pl.pallas_call(
        kernel,
        out_shape=(jax.ShapeDtypeStruct((split * _SUBLANES, lanes), jnp.float32),
                   jax.ShapeDtypeStruct((split * _SUBLANES, lanes), jnp.float32)),
        grid=(split, tpc),
        in_specs=[pl.BlockSpec((tile_rows, lanes), x_map),
                  pl.BlockSpec((1, lanes), lambda c, i: (0, 0))],
        out_specs=(pl.BlockSpec((_SUBLANES, lanes), lambda c, i: (c, 0)),
                   pl.BlockSpec((_SUBLANES, lanes), lambda c, i: (c, 0))),
        compiler_params=pltpu.CompilerParams(
            dimension_semantics=("parallel", "arbitrary"),
            vmem_limit_bytes=_VMEM_LIMIT_BYTES),
    )(x2, mean_t)


def _normalize_call(x2, mean_t, stdinv_t, *, tile_rows, num_tiles, clip):
    rows2, lanes = x2.shape
    kernel = functools.partial(_normalize_kernel, clip=clip)
    return pl.pallas_call(
        kernel,
        out_shape=jax.ShapeDtypeStruct((rows2, lanes), x2.dtype),
        grid=(num_tiles,),
        in_specs=[pl.BlockSpec((tile_rows, lanes), lambda i: (i, 0)),
                  pl.BlockSpec((1, lanes), lambda i: (0, 0)),
                  pl.BlockSpec((1, lanes), lambda i: (0, 0))],
        out_specs=pl.BlockSpec((tile_rows, lanes), lambda i: (i, 0)),
        compiler_params=pltpu.CompilerParams(
            dimension_semantics=("parallel",),
            vmem_limit_bytes=_VMEM_LIMIT_BYTES),
    )(x2, mean_t, stdinv_t)


# ---------------------------------------------------------------------------
# Jitted device-side steps (single dispatch per forward)
# ---------------------------------------------------------------------------
def _pack(xf, batch, d, k, lanes):
    rows2 = -(-batch // k)
    pad_rows = rows2 * k - batch
    if pad_rows:
        # Pad value is irrelevant: padded elements are masked in-kernel.
        xf = jnp.concatenate([xf, jnp.zeros((pad_rows, d), xf.dtype)], axis=0)
    return xf.reshape(rows2, lanes), rows2, pad_rows


@functools.partial(jax.jit,
                   static_argnames=("eps", "clip", "fused_max_bytes",
                                    "tile_bytes"))
def _train_step(x, mean, var, rate, *, eps, clip, fused_max_bytes, tile_bytes):
    shape = x.shape
    batch = shape[0]
    d = math.prod(shape[1:]) if len(shape) > 1 else 1
    k, lanes = _layout(d)
    xf = x.reshape(batch, d)
    x2, rows2, pad_rows = _pack(xf, batch, d, k, lanes)

    mean_t = jnp.tile(mean, (1, k)) if k > 1 else mean
    var_t = jnp.tile(var, (1, k)) if k > 1 else var
    rate_arr = jnp.asarray(rate, jnp.float32).reshape(1)

    fused_ok = (lanes == _LANES or k == 1) and (rows2 * lanes * 4 <= fused_max_bytes)
    if fused_ok:
        y2, mean_t_new, var_t_new, stdinv_t_new = _fused_call(
            x2, mean_t, var_t, rate_arr, k=k, d=d, batch=batch, eps=eps, clip=clip)
        mean_new = mean_t_new[:, :d]
        var_new = var_t_new[:, :d]
    else:
        tile_rows, num_tiles = _tile_rows(rows2, lanes, tile_bytes)
        split = 2 if num_tiles >= 2 else 1
        s1, s2 = _stats_call(x2, mean_t, tile_rows=tile_rows,
                             num_tiles=num_tiles, split=split, batch=batch, d=d)
        # Fold: core rows x sublane rows x lane groups -> per-feature (1, d).
        s1 = jnp.sum(s1.reshape(-1, k, d), axis=(0, 1)).reshape(1, d)
        s2 = jnp.sum(s2.reshape(-1, k, d), axis=(0, 1)).reshape(1, d)
        inv_b = 1.0 / batch
        m1 = s1 * inv_b
        var_x = jnp.maximum(s2 * inv_b - m1 * m1, 0.0)
        mean_new = mean + rate * m1
        var_new = var + rate * (var_x - var + m1 * (m1 - rate * m1))
        stdinv_new = jax.lax.rsqrt(var_new + eps)
        mean_t_new = jnp.tile(mean_new, (1, k)) if k > 1 else mean_new
        stdinv_t_new = jnp.tile(stdinv_new, (1, k)) if k > 1 else stdinv_new
        y2 = _normalize_call(x2, mean_t_new, stdinv_t_new, tile_rows=tile_rows,
                             num_tiles=num_tiles, clip=clip)

    y = y2.reshape(rows2 * k, d)
    if pad_rows:
        y = y[:batch]
    return y.reshape(shape), mean_new, var_new, mean_t_new, stdinv_t_new


@functools.partial(jax.jit, static_argnames=("clip", "tile_bytes"))
def _eval_step(x, mean_t, stdinv_t, *, clip, tile_bytes):
    shape = x.shape
    batch = shape[0]
    d = math.prod(shape[1:]) if len(shape) > 1 else 1
    lanes = mean_t.shape[1]
    k = lanes // d
    xf = x.reshape(batch, d)
    x2, rows2, pad_rows = _pack(xf, batch, d, k, lanes)
    tile_rows, num_tiles = _tile_rows(rows2, lanes, tile_bytes)
    y2 = _normalize_call(x2, mean_t, stdinv_t, tile_rows=tile_rows,
                         num_tiles=num_tiles, clip=clip)
    y = y2.reshape(rows2 * k, d)
    if pad_rows:
        y = y[:batch]
    return y.reshape(shape)


@functools.partial(jax.jit, static_argnames=("k", "eps"))
def _cache_step(mean, var, *, k, eps):
    stdinv = jax.lax.rsqrt(var + eps)
    if k > 1:
        return jnp.tile(mean, (1, k)), jnp.tile(stdinv, (1, k))
    return mean, stdinv


# ---------------------------------------------------------------------------
# Module wrapper
# ---------------------------------------------------------------------------
class EmpiricalNormalizationPallas:
    """JAX/Pallas port of EmpiricalNormalization (batch_axis=0)."""

    def __init__(self, shape, eps=0.01, until=None, clip_threshold=None,
                 is_training=True):
        if isinstance(shape, int):
            shape = (shape,)
        self.feature_shape = tuple(int(s) for s in shape)
        self._d = math.prod(self.feature_shape) if self.feature_shape else 1
        self.eps = float(eps)
        self.until = until
        self.clip_threshold = None if clip_threshold is None else float(clip_threshold)
        self.is_training = is_training
        self._k, self._lanes = _layout(self._d)
        self._mean = jnp.zeros((1, self._d), jnp.float32)
        self._var = jnp.ones((1, self._d), jnp.float32)
        self.count = 0                       # exact host-side integer count
        self._mean_t = None                  # cached lane-tiled mean
        self._stdinv_t = None                # cached lane-tiled rsqrt(var + eps)
        self._fused_max_bytes = _FUSED_MAX_BYTES
        self._tile_bytes = _TARGET_TILE_BYTES

    # ---- torch-module-compatible accessors ---------------------------------
    @property
    def mean(self):
        return self._mean.reshape(self.feature_shape)

    @property
    def std(self):
        return jnp.sqrt(self._var).reshape(self.feature_shape)

    def set_training_mode(self):
        self.is_training = True

    def set_validation_mode(self):
        self.is_training = False

    def inverse(self, y):
        std = jnp.sqrt(self._var + self.eps)
        return (y.reshape(y.shape[0], self._d) * std + self._mean).reshape(y.shape)

    def load_numpy(self, mean, var, count):
        self._mean = jnp.asarray(mean, jnp.float32).reshape(1, self._d)
        self._var = jnp.asarray(var, jnp.float32).reshape(1, self._d)
        self.count = int(count)
        self._mean_t = None
        self._stdinv_t = None

    def _refresh_cache(self):
        if self._mean_t is None or self._stdinv_t is None:
            self._mean_t, self._stdinv_t = _cache_step(
                self._mean, self._var, k=self._k, eps=self.eps)

    # ---- forward ------------------------------------------------------------
    def __call__(self, x):
        batch = int(x.shape[0])
        if batch == 0:
            return x

        do_update = bool(self.is_training and
                         (self.until is None or self.count < self.until))
        if do_update:
            new_count = self.count + batch
            rate = float(batch) / float(new_count)         # exact host ints
            y, mean_new, var_new, mean_t, stdinv_t = _train_step(
                x, self._mean, self._var, rate,
                eps=self.eps, clip=self.clip_threshold,
                fused_max_bytes=self._fused_max_bytes,
                tile_bytes=self._tile_bytes)
            self._mean, self._var = mean_new, var_new
            self._mean_t, self._stdinv_t = mean_t, stdinv_t
            self.count = new_count
            return y

        # Eval / frozen stats: stats kernel skipped entirely.
        self._refresh_cache()
        return _eval_step(x, self._mean_t, self._stdinv_t,
                          clip=self.clip_threshold, tile_bytes=self._tile_bytes)


# ---------------------------------------------------------------------------
# Pure-JAX reference (mirrors the torch forward), for verification
# ---------------------------------------------------------------------------
def _reference_forward(x, mean, var, count, eps, clip_threshold, do_update):
    b = x.shape[0]
    if do_update:
        new_count = count + b
        rate = b / new_count
        mean_x = jnp.mean(x, axis=0, keepdims=True)
        var_x = jnp.mean((x - mean_x) ** 2, axis=0, keepdims=True)
        delta = mean_x - mean
        mean = mean + rate * delta
        var = var + rate * (var_x - var + delta * (mean_x - mean))
    out = (x - mean) * (var + eps) ** (-0.5)
    if clip_threshold is not None:
        out = jnp.clip(out, -clip_threshold, clip_threshold)
    return out, mean, var


if __name__ == "__main__":
    key = jax.random.PRNGKey(0)
    k1, k2, k3 = jax.random.split(key, 3)
    D = 32
    eps, clip = 0.01, 5.0

    norm = EmpiricalNormalizationPallas((D,), eps=eps, clip_threshold=clip,
                                        is_training=True)

    # 1) small batch -> fused single-kernel path (k=4 lane packing).
    x1 = jax.random.normal(k1, (8, D), dtype=jnp.float32) * 3.0 + 1.5
    y1 = jax.block_until_ready(norm(x1))
    y1_ref, m_ref, v_ref = _reference_forward(
        x1, jnp.zeros((1, D), jnp.float32), jnp.ones((1, D), jnp.float32),
        0, eps, clip, do_update=True)
    assert jnp.allclose(y1, y1_ref, atol=1e-5, rtol=1e-5)
    assert jnp.allclose(norm._mean, m_ref, atol=1e-5, rtol=1e-5)
    assert jnp.allclose(norm._var, v_ref, atol=1e-5, rtol=1e-5)

    # 2) medium batch -> still fused (x read from HBM exactly once).
    x2 = jax.random.normal(k2, (5000, D), dtype=jnp.float32) * 2.0 - 0.5
    y2 = jax.block_until_ready(norm(x2))
    y2_ref, m_ref, v_ref = _reference_forward(x2, m_ref, v_ref, 8, eps, clip,
                                              do_update=True)
    assert jnp.allclose(y2, y2_ref, atol=1e-4, rtol=1e-4)
    assert jnp.allclose(norm._mean, m_ref, atol=1e-4, rtol=1e-4)
    assert jnp.allclose(norm._var, v_ref, atol=1e-4, rtol=1e-4)
    assert norm.count == 5008

    # 3) force the two-pass tiled path: multi-tile grid, 2-way core split of the
    #    stats reduction, ragged batch (in-kernel masking + clamped tile).
    norm2 = EmpiricalNormalizationPallas((D,), eps=eps, clip_threshold=clip,
                                         is_training=True)
    norm2._fused_max_bytes = 0           # disable the fused path
    norm2._tile_bytes = 64 * 1024        # tiny tiles -> 9 tiles across 2 cores
    norm2._mean, norm2._var, norm2.count = m_ref, v_ref, norm.count
    x3 = jax.random.normal(k3, (4603, D), dtype=jnp.float32) + 0.3
    y3 = jax.block_until_ready(norm2(x3))
    y3_ref, m_ref, v_ref = _reference_forward(x3, m_ref, v_ref, norm.count,
                                              eps, clip, do_update=True)
    assert jnp.allclose(y3, y3_ref, atol=1e-4, rtol=1e-4)
    assert jnp.allclose(norm2._mean, m_ref, atol=1e-4, rtol=1e-4)
    assert jnp.allclose(norm2._var, v_ref, atol=1e-4, rtol=1e-4)

    # 4) eval / frozen-stat path (stats kernel skipped entirely).
    norm2.set_validation_mode()
    y4 = jax.block_until_ready(norm2(x1))
    y4_ref, _, _ = _reference_forward(x1, m_ref, v_ref, norm2.count, eps, clip,
                                      do_update=False)
    assert jnp.allclose(y4, y4_ref, atol=1e-5, rtol=1e-5)

    print("KERNEL_OK")
</pallas_src>

<mosaic_0001>
module attributes {stable_mosaic.version = 11 : i64} {
  func.func @_fused_train_kernel(%arg0: i32, %arg1: memref<2x128xf32, #tpu.memory_space<vmem>>, %arg2: memref<1x128xf32, #tpu.memory_space<vmem>>, %arg3: memref<1x128xf32, #tpu.memory_space<vmem>>, %arg4: memref<1xf32, #tpu.memory_space<smem>>, %arg5: memref<2x128xf32, #tpu.memory_space<vmem>>, %arg6: memref<1x128xf32, #tpu.memory_space<vmem>>, %arg7: memref<1x128xf32, #tpu.memory_space<vmem>>, %arg8: memref<1x128xf32, #tpu.memory_space<vmem>>) attributes {dimension_semantics = [#tpu.dimension_semantics<arbitrary>], iteration_bounds = array<i64: 1>, scalar_prefetch = 0 : i64, scratch_operands = 0 : i64, tpu.core_type = #tpu.core_type<tc>, window_params = [{pipeline_mode = #tpu.pipeline_mode<synchronous>, transform_indices = @transform_0, window_bounds = array<i64: 2, 128>}, {pipeline_mode = #tpu.pipeline_mode<synchronous>, transform_indices = @transform_1, window_bounds = array<i64: 1, 128>}, {pipeline_mode = #tpu.pipeline_mode<synchronous>, transform_indices = @transform_2, window_bounds = array<i64: 1, 128>}, {transform_indices = @transform_3, window_bounds = array<i64: 1>}, {pipeline_mode = #tpu.pipeline_mode<synchronous>, transform_indices = @transform_4, window_bounds = array<i64: 2, 128>}, {pipeline_mode = #tpu.pipeline_mode<synchronous>, transform_indices = @transform_5, window_bounds = array<i64: 1, 128>}, {pipeline_mode = #tpu.pipeline_mode<synchronous>, transform_indices = @transform_6, window_bounds = array<i64: 1, 128>}, {pipeline_mode = #tpu.pipeline_mode<synchronous>, transform_indices = @transform_7, window_bounds = array<i64: 1, 128>}]} {
    %c0 = arith.constant 0 : index
    %c0_0 = arith.constant 0 : index
    %0 = vector.load %arg2[%c0, %c0_0] : memref<1x128xf32, #tpu.memory_space<vmem>>, vector<1x128xf32>
    %c0_1 = arith.constant 0 : index
    %c0_2 = arith.constant 0 : index
    %1 = vector.load %arg3[%c0_1, %c0_2] : memref<1x128xf32, #tpu.memory_space<vmem>>, vector<1x128xf32>
    %cst = arith.constant 0.000000e+00 : f32
    %2 = vector.broadcast %cst : f32 to vector<1x128xf32>
    %cst_3 = arith.constant 0.000000e+00 : f32
    %3 = vector.broadcast %cst_3 : f32 to vector<1x128xf32>
    %c0_4 = arith.constant 0 : index
    %c0_5 = arith.constant 0 : index
    %4 = vector.load %arg1[%c0_4, %c0_5] : memref<2x128xf32, #tpu.memory_space<vmem>>, vector<2x128xf32>
    %5 = vector.broadcast %0 : vector<1x128xf32> to vector<2x128xf32>
    %6 = arith.subf %4, %5 : vector<2x128xf32>
    %cst_6 = arith.constant dense<0.000000e+00> : vector<128xf32>
    %7 = vector.multi_reduction <add>, %6, %cst_6 [0] : vector<2x128xf32> to vector<128xf32>
    %8 = vector.shape_cast %7 : vector<128xf32> to vector<1x128xf32>
    %9 = arith.addf %2, %8 : vector<1x128xf32>
    %10 = arith.mulf %6, %6 : vector<2x128xf32>
    %cst_7 = arith.constant dense<0.000000e+00> : vector<128xf32>
    %11 = vector.multi_reduction <add>, %10, %cst_7 [0] : vector<2x128xf32> to vector<128xf32>
    %12 = vector.shape_cast %11 : vector<128xf32> to vector<1x128xf32>
    %13 = arith.addf %3, %12 : vector<1x128xf32>
    %c32_i32 = arith.constant 32 : i32
    %14 = tpu.dynamic_rotate %9 by %c32_i32 dim 1 : vector<1x128xf32>, i32 -> vector<1x128xf32>
    %15 = arith.addf %9, %14 : vector<1x128xf32>
    %c32_i32_8 = arith.constant 32 : i32
    %16 = tpu.dynamic_rotate %13 by %c32_i32_8 dim 1 : vector<1x128xf32>, i32 -> vector<1x128xf32>
    %17 = arith.addf %13, %16 : vector<1x128xf32>
    %c64_i32 = arith.constant 64 : i32
    %18 = tpu.dynamic_rotate %9 by %c64_i32 dim 1 : vector<1x128xf32>, i32 -> vector<1x128xf32>
    %19 = arith.addf %15, %18 : vector<1x128xf32>
    %c64_i32_9 = arith.constant 64 : i32
    %20 = tpu.dynamic_rotate %13 by %c64_i32_9 dim 1 : vector<1x128xf32>, i32 -> vector<1x128xf32>
    %21 = arith.addf %17, %20 : vector<1x128xf32>
    %c96_i32 = arith.constant 96 : i32
    %22 = tpu.dynamic_rotate %9 by %c96_i32 dim 1 : vector<1x128xf32>, i32 -> vector<1x128xf32>
    %23 = arith.addf %19, %22 : vector<1x128xf32>
    %c96_i32_10 = arith.constant 96 : i32
    %24 = tpu.dynamic_rotate %13 by %c96_i32_10 dim 1 : vector<1x128xf32>, i32 -> vector<1x128xf32>
    %25 = arith.addf %21, %24 : vector<1x128xf32>
    %cst_11 = arith.constant 1.250000e-01 : f32
    %26 = vector.broadcast %cst_11 : f32 to vector<1x128xf32>
    %27 = arith.mulf %23, %26 : vector<1x128xf32>
    %cst_12 = arith.constant 1.250000e-01 : f32
    %28 = vector.broadcast %cst_12 : f32 to vector<1x128xf32>
    %29 = arith.mulf %25, %28 : vector<1x128xf32>
    %30 = arith.mulf %27, %27 : vector<1x128xf32>
    %31 = arith.subf %29, %30 : vector<1x128xf32>
    %cst_13 = arith.constant 0.000000e+00 : f32
    %32 = vector.broadcast %cst_13 : f32 to vector<1x128xf32>
    %33 = arith.maximumf %31, %32 : vector<1x128xf32>
    %c0_14 = arith.constant 0 : index
    %34 = memref.load %arg4[%c0_14] : memref<1xf32, #tpu.memory_space<smem>>
    %35 = vector.broadcast %34 : f32 to vector<1x128xf32>
    %36 = arith.mulf %35, %27 : vector<1x128xf32>
    %37 = arith.addf %0, %36 : vector<1x128xf32>
    %38 = arith.subf %33, %1 : vector<1x128xf32>
    %39 = vector.broadcast %34 : f32 to vector<1x128xf32>
    %40 = arith.mulf %39, %27 : vector<1x128xf32>
    %41 = arith.subf %27, %40 : vector<1x128xf32>
    %42 = arith.mulf %27, %41 : vector<1x128xf32>
    %43 = arith.addf %38, %42 : vector<1x128xf32>
    %44 = vector.broadcast %34 : f32 to vector<1x128xf32>
    %45 = arith.mulf %44, %43 : vector<1x128xf32>
    %46 = arith.addf %1, %45 : vector<1x128xf32>
    %cst_15 = arith.constant 0.00999999977 : f32
    %47 = vector.broadcast %cst_15 : f32 to vector<1x128xf32>
    %48 = arith.addf %46, %47 : vector<1x128xf32>
    %49 = math.rsqrt %48 : vector<1x128xf32>
    %c0_16 = arith.constant 0 : index
    %c0_17 = arith.constant 0 : index
    %50 = vector.load %arg6[%c0_16, %c0_17] : memref<1x128xf32, #tpu.memory_space<vmem>>, vector<1x128xf32>
    tpu.vector_store %arg6[%c0_16, %c0_17], %37 {strides = array<i32>} : memref<1x128xf32, #tpu.memory_space<vmem>>, vector<1x128xf32>,
    %c0_18 = arith.constant 0 : index
    %c0_19 = arith.constant 0 : index
    %51 = vector.load %arg7[%c0_18, %c0_19] : memref<1x128xf32, #tpu.memory_space<vmem>>, vector<1x128xf32>
    tpu.vector_store %arg7[%c0_18, %c0_19], %46 {strides = array<i32>} : memref<1x128xf32, #tpu.memory_space<vmem>>, vector<1x128xf32>,
    %c0_20 = arith.constant 0 : index
    %c0_21 = arith.constant 0 : index
    %52 = vector.load %arg8[%c0_20, %c0_21] : memref<1x128xf32, #tpu.memory_space<vmem>>, vector<1x128xf32>
    tpu.vector_store %arg8[%c0_20, %c0_21], %49 {strides = array<i32>} : memref<1x128xf32, #tpu.memory_space<vmem>>, vector<1x128xf32>,
    %c0_22 = arith.constant 0 : index
    %c0_23 = arith.constant 0 : index
    %53 = vector.load %arg1[%c0_22, %c0_23] : memref<2x128xf32, #tpu.memory_space<vmem>>, vector<2x128xf32>
    %54 = vector.broadcast %37 : vector<1x128xf32> to vector<2x128xf32>
    %55 = arith.subf %53, %54 : vector<2x128xf32>
    %56 = vector.broadcast %49 : vector<1x128xf32> to vector<2x128xf32>
    %57 = arith.mulf %55, %56 : vector<2x128xf32>
    %cst_24 = arith.constant -5.000000e+00 : f32
    %cst_25 = arith.constant 5.000000e+00 : f32
    %58 = vector.broadcast %cst_24 : f32 to vector<2x128xf32>
    %59 = arith.maximumf %58, %57 : vector<2x128xf32>
    %60 = vector.broadcast %cst_25 : f32 to vector<2x128xf32>
    %61 = arith.minimumf %60, %59 : vector<2x128xf32>
    %c0_26 = arith.constant 0 : index
    %c0_27 = arith.constant 0 : index
    %62 = vector.load %arg5[%c0_26, %c0_27] : memref<2x128xf32, #tpu.memory_space<vmem>>, vector<2x128xf32>
    tpu.vector_store %arg5[%c0_26, %c0_27], %61 {strides = array<i32>} : memref<2x128xf32, #tpu.memory_space<vmem>>, vector<2x128xf32>,
    return
  }
  func.func @transform_0(%arg0: i32) -> (i32, i32) {
    %c0_i32 = arith.constant 0 : i32
    %c0_i32_0 = arith.constant 0 : i32
    %c0_i32_1 = arith.constant 0 : i32
    return %c0_i32, %c0_i32_0 : i32, i32
  }
  func.func @transform_1(%arg0: i32) -> (i32, i32) {
    %c0_i32 = arith.constant 0 : i32
    %c0_i32_0 = arith.constant 0 : i32
    %c0_i32_1 = arith.constant 0 : i32
    return %c0_i32, %c0_i32_0 : i32, i32
  }
  func.func @transform_2(%arg0: i32) -> (i32, i32) {
    %c0_i32 = arith.constant 0 : i32
    %c0_i32_0 = arith.constant 0 : i32
    %c0_i32_1 = arith.constant 0 : i32
    return %c0_i32, %c0_i32_0 : i32, i32
  }
  func.func @transform_3(%arg0: i32) -> i32 {
    %c0_i32 = arith.constant 0 : i32
    %c0_i32_0 = arith.constant 0 : i32
    return %c0_i32 : i32
  }
  func.func @transform_4(%arg0: i32) -> (i32, i32) {
    %c0_i32 = arith.constant 0 : i32
    %c0_i32_0 = arith.constant 0 : i32
    %c0_i32_1 = arith.constant 0 : i32
    return %c0_i32, %c0_i32_0 : i32, i32
  }
  func.func @transform_5(%arg0: i32) -> (i32, i32) {
    %c0_i32 = arith.constant 0 : i32
    %c0_i32_0 = arith.constant 0 : i32
    %c0_i32_1 = arith.constant 0 : i32
    return %c0_i32, %c0_i32_0 : i32, i32
  }
  func.func @transform_6(%arg0: i32) -> (i32, i32) {
    %c0_i32 = arith.constant 0 : i32
    %c0_i32_0 = arith.constant 0 : i32
    %c0_i32_1 = arith.constant 0 : i32
    return %c0_i32, %c0_i32_0 : i32, i32
  }
  func.func @transform_7(%arg0: i32) -> (i32, i32) {
    %c0_i32 = arith.constant 0 : i32
    %c0_i32_0 = arith.constant 0 : i32
    %c0_i32_1 = arith.constant 0 : i32
    return %c0_i32, %c0_i32_0 : i32, i32
  }
}

</mosaic_0001>

<llo_original>
// kernel: _train_step.1
$region0: #{_train_step.1}
  #allocation0 [shape = 'u32[]', space=smem, size = 0x4, offset = 0x4, fixed_abs, tag = 'smem constant byte address 0x4 - core index']
  #allocation1 [shape = 'u32[144,128]{1,0:T(1,128)}', space=vmem, size = 0x12000, scoped, tag = 'internal scratch']
  #allocation2 [shape = 'f32[1]{0:T(128)S(6)}', space=smem, size = 0x200, scoped, tag = 'scoped memory for _train_step.1']
  %s0 = inlined_call_operand.vmem [shape: f32[2,128], index: 0, kind: input, shape index: {}]
  %s1 = inlined_call_operand.vmem [shape: f32[1,128], index: 1, kind: input, shape index: {}]
  %s2 = inlined_call_operand.vmem [shape: f32[1,128], index: 2, kind: input, shape index: {}]
  %s3 = inlined_call_operand.<no memory space> [shape: f32[1], index: 3, kind: input, shape index: {}]
  %s4 = inlined_call_operand.vmem [shape: f32[2,128], index: 4, kind: output, shape index: {0}]
  %s5 = inlined_call_operand.vmem [shape: f32[1,128], index: 5, kind: output, shape index: {1}]
  %s6 = inlined_call_operand.hbm [shape: f32[1,128], index: 6, kind: output, shape index: {2}]
  %s7 = inlined_call_operand.hbm [shape: f32[1,128], index: 7, kind: output, shape index: {3}]
  %8 = xla_tuple %s4, %s5, %s6, %s7
  %s9 = sld [smem:[#allocation0]]
  $region50: #{_train_step.1} parent=0
    _
  %s11 = ssub.s32 1, %s9
  %s12 = scalar_select 0, %s11, %s9
  %13 = sst [smem:[#allocation2]] %s3
  $region1: #{_train_step.1} parent=0
    #allocation3 [shape = 'u8[512]{0}', space=vmem, size = 0x400, scoped, tag = 'output window, operand 2, single buffered']
    #allocation4 [shape = 's32[1]{0}', space=sflag, size = 0x4, scoped, tag = 'scoped memory for _train_step.1']
    #allocation5 [shape = 'u8[512]{0}', space=vmem, size = 0x400, scoped, tag = 'output window, operand 3, single buffered']
    #allocation6 [shape = 's32[1]{0}', space=sflag, size = 0x4, scoped, tag = 'scoped memory for _train_step.1']
    %14 = vsyncpa [#allocation4], 0
    %15 = vsyncpa [#allocation6], 0
    // Predicated region
    $region2: #{_train_step.1} parent=1 // pred_check
      _
    $region3: #{_train_step.1} parent=1 // pred_check_branch
      %17 = sbr.rel (0) target = $region5
    $region4: #{_train_step.1} parent=1 // pred_region
      _
    $region5: #{_train_step.1} parent=1 // pred_fallthru
      _
    // Predicated region
    $region6: #{_train_step.1} parent=1 // pred_check
      _
    $region7: #{_train_step.1} parent=1 // pred_check_branch
      %19 = sbr.rel (0) target = $region9
    $region8: #{_train_step.1} parent=1 // pred_region
      _
    $region9: #{_train_step.1} parent=1 // pred_fallthru
      _
    // Predicated region
    $region10: #{_train_step.1} parent=1 // pred_check
      _
    $region11: #{_train_step.1} parent=1 // pred_check_branch
      %21 = sbr.rel (0) target = $region13
    $region12: #{_train_step.1} parent=1 // pred_region
      _
    $region13: #{_train_step.1} parent=1 // pred_fallthru
      _
    // Predicated region
    $region14: #{_train_step.1} parent=1 // pred_check
      _
    $region15: #{_train_step.1} parent=1 // pred_check_branch
      %23 = sbr.rel (0) target = $region17
    $region16: #{_train_step.1} parent=1 // pred_region
      _
    $region17: #{_train_step.1} parent=1 // pred_fallthru
      _
    %v24 = vld [vmem:[%s1] sm:$0x1]
    %v25 = vld [vmem:[%s2] sm:$0x1]
    %v26 = vld [vmem:[%s0] sm:$0x3]
    %v28 = vlaneseq
    %v29 = vshrl.u32 %v28, 7
    %v30 = vsub.s32 0, %v29
    %v31 = vrot.slane %v24, %v30
    %v33 = vsub.f32 %v26, %v31
    %vm34 = vcmask 1041408
    %v35 = vsel %vm34, %v33, 0.0
    %v36 = vrot.slane %v35, 4
    %v37 = vadd.f32 %v35, %v36
    %v38 = vrot.slane %v37, 2
    %v39 = vadd.f32 %v37, %v38
    %v40 = vrot.slane %v39, 1
    %v41 = vadd.f32 %v39, %v40
    %v42 = vadd.f32 %v41, 0.0
    %v43 = vmul.f32 %v33, %v33
    %v44 = vsel %vm34, %v43, 0.0
    %v45 = vrot.slane %v44, 4
    %v46 = vadd.f32 %v44, %v45
    %v47 = vrot.slane %v46, 2
    %v48 = vadd.f32 %v46, %v47
    %v49 = vrot.slane %v48, 1
    %v50 = vadd.f32 %v48, %v49
    %v51 = vadd.f32 %v50, 0.0
    %52 = vrot.lane.b32.xlu0 %v42, 32
    %v53 = vpop.permute.xlu0 %52
    %v54 = vadd.f32 %v42, %v53
    %55 = vrot.lane.b32.xlu0 %v51, 32
    %v56 = vpop.permute.xlu0 %55
    %v57 = vadd.f32 %v51, %v56
    %58 = vrot.lane.b32.xlu0 %v42, 64
    %v59 = vpop.permute.xlu0 %58
    %v60 = vadd.f32 %v54, %v59
    %61 = vrot.lane.b32.xlu0 %v51, 64
    %v62 = vpop.permute.xlu0 %61
    %v63 = vadd.f32 %v57, %v62
    %64 = vrot.lane.b32.xlu0 %v42, 96
    %v65 = vpop.permute.xlu0 %64
    %v66 = vadd.f32 %v60, %v65
    %67 = vrot.lane.b32.xlu0 %v51, 96
    %v68 = vpop.permute.xlu0 %67
    %v69 = vadd.f32 %v63, %v68
    %v70 = vmul.f32 %v66, 0.125
    %v71 = vmul.f32 %v69, 0.125
    %v72 = vmul.f32 %v70, %v70
    %v73 = vsub.f32 %v71, %v72
    %v74 = vmax.f32 %v73, 0.0
    %s75 = sld [smem:[#allocation2]]
    %v76 = vstv %s75
    %v77 = vmul.f32 %v76, %v70
    %v78 = vadd.f32 %v24, %v77
    %v79 = vsub.f32 %v74, %v25
    %v80 = vsub.f32 %v70, %v77
    %v81 = vmul.f32 %v70, %v80
    %v82 = vadd.f32 %v79, %v81
    %v83 = vmul.f32 %v76, %v82
    %v84 = vadd.f32 %v25, %v83
    %v85 = vadd.f32 %v84, 0.01
    %v86 = vrsqrt.pop %v85
    %87 = vst [vmem:[%s5] sm:$0x1] %v78
    %88 = vst [vmem:[#allocation3] sm:$0x1] %v84
    %89 = vst [vmem:[#allocation5] sm:$0x1] %v86
    %v90 = vld [vmem:[%s0] sm:$0x3]
    %v92 = vlaneseq
    %v93 = vshrl.u32 %v92, 7
    %v94 = vsub.s32 0, %v93
    %v95 = vrot.slane %v78, %v94
    %v97 = vsub.f32 %v90, %v95
    %v99 = vlaneseq
    %v100 = vshrl.u32 %v99, 7
    %v101 = vsub.s32 0, %v100
    %v102 = vrot.slane %v86, %v101
    %v104 = vmul.f32 %v97, %v102
    %v105 = vmax.f32 %v104, -5.0
    %v106 = vmin.f32 %v105, 5.0
    %107 = vst [vmem:[%s4] sm:$0x3] %v106
    // Predicated region
    $region18: #{_train_step.1} parent=1 // pred_check
      _
    $region19: #{_train_step.1} parent=1 // pred_check_branch
      %109 = sbr.rel (0) target = $region21
    $region20: #{_train_step.1} parent=1 // pred_region
      _
    $region21: #{_train_step.1} parent=1 // pred_fallthru
      _
    // Predicated region
    $region22: #{_train_step.1} parent=1 // pred_check
      _
    $region23: #{_train_step.1} parent=1 // pred_check_branch
      %111 = sbr.rel (0) target = $region25
    $region24: #{_train_step.1} parent=1 // pred_region
      _
    $region25: #{_train_step.1} parent=1 // pred_fallthru
      _
    // Predicated region
    $region26: #{_train_step.1} parent=1 // pred_check
      _
    $region27: #{_train_step.1} parent=1 // pred_check_branch
      %113 = sbr.rel (0) target = $region29
    $region28: #{_train_step.1} parent=1 // pred_region
      %s115 = ssub.s32 16, 16
      %116 = vsyncadd [#allocation4], %s115
      %s118 = sshll.u32 [#allocation3], 4
      %s119 = int_to_ptr.vmem [resolvable:$true] %s118
      %121 = dma.vmem_to_hbm [thread:$0]  %s119, 16, %s6, [#allocation4]
    $region29: #{_train_step.1} parent=1 // pred_fallthru
      _
    // Predicated region
    $region30: #{_train_step.1} parent=1 // pred_check
      _
    $region31: #{_train_step.1} parent=1 // pred_check_branch
      %123 = sbr.rel (0) target = $region33
    $region32: #{_train_step.1} parent=1 // pred_region
      %s125 = ssub.s32 16, 16
      %126 = vsyncadd [#allocation6], %s125
      %s128 = sshll.u32 [#allocation5], 4
      %s129 = int_to_ptr.vmem [resolvable:$true] %s128
      %131 = dma.vmem_to_hbm [thread:$0]  %s129, 16, %s7, [#allocation6]
    $region33: #{_train_step.1} parent=1 // pred_fallthru
      _
    // Predicated region
    $region34: #{_train_step.1} parent=1 // pred_check
      _
    $region35: #{_train_step.1} parent=1 // pred_check_branch
      %133 = sbr.rel (0) target = $region37
    $region36: #{_train_step.1} parent=1 // pred_region
      _
    $region37: #{_train_step.1} parent=1 // pred_fallthru
      _
    // Predicated region
    $region38: #{_train_step.1} parent=1 // pred_check
      _
    $region39: #{_train_step.1} parent=1 // pred_check_branch
      %135 = sbr.rel (0) target = $region41
    $region40: #{_train_step.1} parent=1 // pred_region
      _
    $region41: #{_train_step.1} parent=1 // pred_fallthru
      _
    // Predicated region
    $region42: #{_train_step.1} parent=1 // pred_check
      _
    $region43: #{_train_step.1} parent=1 // pred_check_branch
      %137 = sbr.rel (0) target = $region45
    $region44: #{_train_step.1} parent=1 // pred_region
      %138 = dma.done [#allocation4], 16
    $region45: #{_train_step.1} parent=1 // pred_fallthru
      _
    // Predicated region
    $region46: #{_train_step.1} parent=1 // pred_check
      _
    $region47: #{_train_step.1} parent=1 // pred_check_branch
      %140 = sbr.rel (0) target = $region49
    $region48: #{_train_step.1} parent=1 // pred_region
      %141 = dma.done [#allocation6], 16
    $region49: #{_train_step.1} parent=1 // pred_fallthru
      _
    %142 = vsyncpa [#allocation4], 1
    %143 = vsyncpa [#allocation6], 1

</llo_original>
